<compile_context>
chip_gen: v5e
topology: v5e:2x2
jax: 0.10.0
libtpu: 0.0.40
codegen_flags: <defaults>
</compile_context>

<pallas_src>
import functools

import jax
import jax.numpy as jnp
from jax.experimental import pallas as pl
from jax.experimental.pallas import tpu as pltpu

_LANE = 128


def _round_up(x, m):
    return ((x + m - 1) // m) * m


def _conv1x1_tanh_kernel(w_ref, b_ref, x_ref, o_ref, *, cin, cout):
    # w_ref: SMEM (Cout, Cin) f32     b_ref: SMEM (Cout,) f32
    # x_ref: VMEM (Cin, tile_rows, 128)   o_ref: VMEM (Cout, tile_rows, 128)
    # Tiny channel counts: unrolled VPU broadcast-FMA on dense (rows, 128)
    # slabs (full 8x128 vregs), tanh on the EUP, dense unmasked stores.
    for o in range(cout):
        acc = x_ref[0] * w_ref[o, 0]
        for c in range(1, cin):
            acc = acc + x_ref[c] * w_ref[o, c]
        o_ref[o] = jnp.tanh(acc + b_ref[o]).astype(o_ref.dtype)


def _pick_tile_rows(s128, batch, cin, cout):
    # ~3 MiB of HBM traffic per grid step amortizes the ~0.35us/step overhead;
    # double-buffered VMEM footprint ~= 2 * (cin+cout) * tile_rows * 512 bytes
    # (~6 MiB for Cin=4/Cout=2), far below every generation's scoped limit.
    target_step_bytes = 3 * 1024 * 1024
    per_row_bytes = (cin + cout) * _LANE * 4
    t = max(8, ((target_step_bytes // per_row_bytes) // 8) * 8)
    if batch == 1 and s128 >= 16:
        # v7x has 2 TensorCores per chip: keep >= 2 steps on a parallel axis.
        t = min(t, _round_up(pl.cdiv(s128, 2), 8))
    if t >= s128:
        return s128  # single full block (block == full dim, no 8-div needed)
    return t  # multiple of 8 by construction


def object_size_net_forward(x_nchw, weight, bias, *, tile_rows=None):
    """Forward pass matching ObjectSizeNet (1x1 Conv2d + Tanh).

    x_nchw: [B, Cin, H, W] float32
    weight: [Cout, Cin, 1, 1] float32 (PyTorch Conv2d layout)
    bias:   [Cout] float32
    returns [B, Cout, H, W] float32
    """
    B, Cin, H, W = x_nchw.shape
    Cout = weight.shape[0]
    S = H * W

    if x_nchw.dtype != jnp.float32:
        x_nchw = x_nchw.astype(jnp.float32)
    w_mat = weight.reshape(Cout, Cin)
    if w_mat.dtype != jnp.float32:
        w_mat = w_mat.astype(jnp.float32)
    b_vec = bias.reshape(Cout)
    if b_vec.dtype != jnp.float32:
        b_vec = b_vec.astype(jnp.float32)

    # Lane-dense spatial layout: (B, Cin, S128, 128).  Pure reshape when
    # S % 128 == 0; otherwise pad by < 128 lanes only (never to a tile mult).
    S_lane = _round_up(S, _LANE)
    x_flat = x_nchw.reshape(B, Cin, S)
    if S_lane != S:
        x_flat = jnp.pad(x_flat, ((0, 0), (0, 0), (0, S_lane - S)))
    S128 = S_lane // _LANE
    x_4d = x_flat.reshape(B, Cin, S128, _LANE)

    if tile_rows is None:
        tile_rows = _pick_tile_rows(S128, B, Cin, Cout)
    tile_rows = min(tile_rows, S128)

    grid = (B, pl.cdiv(S128, tile_rows))  # ragged edge masked by Pallas

    kernel = functools.partial(_conv1x1_tanh_kernel, cin=Cin, cout=Cout)

    out_4d = pl.pallas_call(
        kernel,
        out_shape=jax.ShapeDtypeStruct((B, Cout, S128, _LANE), jnp.float32),
        grid=grid,
        in_specs=[
            # Weight / bias: whole arrays, SMEM-resident, not pipelined.
            pl.BlockSpec(memory_space=pltpu.MemorySpace.SMEM),
            pl.BlockSpec(memory_space=pltpu.MemorySpace.SMEM),
            # x: (Cin, tile_rows, 128) block per (batch, row-chunk) grid point.
            pl.BlockSpec((None, Cin, tile_rows, _LANE),
                         lambda b, s: (b, 0, s, 0)),
        ],
        out_specs=pl.BlockSpec((None, Cout, tile_rows, _LANE),
                               lambda b, s: (b, 0, s, 0)),
        compiler_params=pltpu.CompilerParams(
            dimension_semantics=("parallel", "parallel")),
        cost_estimate=pl.CostEstimate(
            flops=2 * B * S * Cin * Cout,
            transcendentals=B * S * Cout,
            bytes_accessed=4 * (B * S * Cin + B * S * Cout + Cout * Cin + Cout),
        ),
    )(w_mat, b_vec, x_4d)

    out = out_4d.reshape(B, Cout, S_lane)
    if S_lane != S:
        out = out[:, :, :S]
    return out.reshape(B, Cout, H, W)


if __name__ == "__main__":
    key = jax.random.PRNGKey(0)
    kx, kw, kb = jax.random.split(key, 3)

    B, Cin, H, W = 2, 4, 16, 16
    Cout = 2

    x = jax.random.normal(kx, (B, Cin, H, W), dtype=jnp.float32)
    # Deterministic synthetic parameters (Conv2d weight shape [Cout, Cin, 1, 1]).
    weight = 0.1 * jax.random.normal(kw, (Cout, Cin, 1, 1), dtype=jnp.float32)
    bias = 0.1 * jax.random.normal(kb, (Cout,), dtype=jnp.float32)

    out = object_size_net_forward(x, weight, bias)
    out = jax.block_until_ready(out)

    # Reference check against plain-JAX 1x1 conv + tanh.
    ref = jnp.tanh(
        jnp.einsum("bchw,oc->bohw", x, weight.reshape(Cout, Cin))
        + bias[None, :, None, None]
    )
    assert out.shape == (B, Cout, H, W)
    assert jnp.allclose(out, ref, atol=1e-5), "mismatch vs reference"

    print("KERNEL_OK")
</pallas_src>

<mosaic_0001>
module attributes {stable_mosaic.version = 11 : i64} {
  func.func @_conv1x1_tanh_kernel(%arg0: i32, %arg1: i32, %arg2: memref<2x4xf32, #tpu.memory_space<smem>>, %arg3: memref<2xf32, #tpu.memory_space<smem>>, %arg4: memref<1x4x2x128xf32, #tpu.memory_space<vmem>>, %arg5: memref<1x2x2x128xf32, #tpu.memory_space<vmem>>) attributes {dimension_semantics = [#tpu.dimension_semantics<parallel>, #tpu.dimension_semantics<parallel>], iteration_bounds = array<i64: 2, 1>, scalar_prefetch = 0 : i64, scratch_operands = 0 : i64, tpu.core_type = #tpu.core_type<tc>, window_params = [{transform_indices = @transform_0, window_bounds = array<i64: 2, 4>}, {transform_indices = @transform_1, window_bounds = array<i64: 2>}, {transform_indices = @transform_2, window_bounds = array<i64: 1, 4, 2, 128>}, {transform_indices = @transform_3, window_bounds = array<i64: 1, 2, 2, 128>}]} {
    %c0 = arith.constant 0 : index
    %c0_0 = arith.constant 0 : index
    %c0_1 = arith.constant 0 : index
    %c0_2 = arith.constant 0 : index
    %0 = vector.load %arg4[%c0, %c0_0, %c0_1, %c0_2] : memref<1x4x2x128xf32, #tpu.memory_space<vmem>>, vector<1x1x2x128xf32>
    %1 = vector.shape_cast %0 : vector<1x1x2x128xf32> to vector<2x128xf32>
    %c0_3 = arith.constant 0 : index
    %c0_4 = arith.constant 0 : index
    %2 = memref.load %arg2[%c0_3, %c0_4] : memref<2x4xf32, #tpu.memory_space<smem>>
    %3 = vector.broadcast %2 : f32 to vector<2x128xf32>
    %4 = arith.mulf %1, %3 : vector<2x128xf32>
    %c0_5 = arith.constant 0 : index
    %c1 = arith.constant 1 : index
    %c0_6 = arith.constant 0 : index
    %c0_7 = arith.constant 0 : index
    %5 = vector.load %arg4[%c0_5, %c1, %c0_6, %c0_7] : memref<1x4x2x128xf32, #tpu.memory_space<vmem>>, vector<1x1x2x128xf32>
    %6 = vector.shape_cast %5 : vector<1x1x2x128xf32> to vector<2x128xf32>
    %c0_8 = arith.constant 0 : index
    %c1_9 = arith.constant 1 : index
    %7 = memref.load %arg2[%c0_8, %c1_9] : memref<2x4xf32, #tpu.memory_space<smem>>
    %8 = vector.broadcast %7 : f32 to vector<2x128xf32>
    %9 = arith.mulf %6, %8 : vector<2x128xf32>
    %10 = arith.addf %4, %9 : vector<2x128xf32>
    %c0_10 = arith.constant 0 : index
    %c2 = arith.constant 2 : index
    %c0_11 = arith.constant 0 : index
    %c0_12 = arith.constant 0 : index
    %11 = vector.load %arg4[%c0_10, %c2, %c0_11, %c0_12] : memref<1x4x2x128xf32, #tpu.memory_space<vmem>>, vector<1x1x2x128xf32>
    %12 = vector.shape_cast %11 : vector<1x1x2x128xf32> to vector<2x128xf32>
    %c0_13 = arith.constant 0 : index
    %c2_14 = arith.constant 2 : index
    %13 = memref.load %arg2[%c0_13, %c2_14] : memref<2x4xf32, #tpu.memory_space<smem>>
    %14 = vector.broadcast %13 : f32 to vector<2x128xf32>
    %15 = arith.mulf %12, %14 : vector<2x128xf32>
    %16 = arith.addf %10, %15 : vector<2x128xf32>
    %c0_15 = arith.constant 0 : index
    %c3 = arith.constant 3 : index
    %c0_16 = arith.constant 0 : index
    %c0_17 = arith.constant 0 : index
    %17 = vector.load %arg4[%c0_15, %c3, %c0_16, %c0_17] : memref<1x4x2x128xf32, #tpu.memory_space<vmem>>, vector<1x1x2x128xf32>
    %18 = vector.shape_cast %17 : vector<1x1x2x128xf32> to vector<2x128xf32>
    %c0_18 = arith.constant 0 : index
    %c3_19 = arith.constant 3 : index
    %19 = memref.load %arg2[%c0_18, %c3_19] : memref<2x4xf32, #tpu.memory_space<smem>>
    %20 = vector.broadcast %19 : f32 to vector<2x128xf32>
    %21 = arith.mulf %18, %20 : vector<2x128xf32>
    %22 = arith.addf %16, %21 : vector<2x128xf32>
    %c0_20 = arith.constant 0 : index
    %23 = memref.load %arg3[%c0_20] : memref<2xf32, #tpu.memory_space<smem>>
    %24 = vector.broadcast %23 : f32 to vector<2x128xf32>
    %25 = arith.addf %22, %24 : vector<2x128xf32>
    %26 = math.tanh %25 : vector<2x128xf32>
    %c0_21 = arith.constant 0 : index
    %c0_22 = arith.constant 0 : index
    %c0_23 = arith.constant 0 : index
    %c0_24 = arith.constant 0 : index
    %27 = vector.load %arg5[%c0_21, %c0_22, %c0_23, %c0_24] : memref<1x2x2x128xf32, #tpu.memory_space<vmem>>, vector<1x1x2x128xf32>
    %28 = vector.shape_cast %27 : vector<1x1x2x128xf32> to vector<2x128xf32>
    %29 = vector.shape_cast %26 : vector<2x128xf32> to vector<1x1x2x128xf32>
    tpu.vector_store %arg5[%c0_21, %c0_22, %c0_23, %c0_24], %29 {strides = array<i32>} : memref<1x2x2x128xf32, #tpu.memory_space<vmem>>, vector<1x1x2x128xf32>,
    %c0_25 = arith.constant 0 : index
    %c0_26 = arith.constant 0 : index
    %c0_27 = arith.constant 0 : index
    %c0_28 = arith.constant 0 : index
    %30 = vector.load %arg4[%c0_25, %c0_26, %c0_27, %c0_28] : memref<1x4x2x128xf32, #tpu.memory_space<vmem>>, vector<1x1x2x128xf32>
    %31 = vector.shape_cast %30 : vector<1x1x2x128xf32> to vector<2x128xf32>
    %c1_29 = arith.constant 1 : index
    %c0_30 = arith.constant 0 : index
    %32 = memref.load %arg2[%c1_29, %c0_30] : memref<2x4xf32, #tpu.memory_space<smem>>
    %33 = vector.broadcast %32 : f32 to vector<2x128xf32>
    %34 = arith.mulf %31, %33 : vector<2x128xf32>
    %c0_31 = arith.constant 0 : index
    %c1_32 = arith.constant 1 : index
    %c0_33 = arith.constant 0 : index
    %c0_34 = arith.constant 0 : index
    %35 = vector.load %arg4[%c0_31, %c1_32, %c0_33, %c0_34] : memref<1x4x2x128xf32, #tpu.memory_space<vmem>>, vector<1x1x2x128xf32>
    %36 = vector.shape_cast %35 : vector<1x1x2x128xf32> to vector<2x128xf32>
    %c1_35 = arith.constant 1 : index
    %c1_36 = arith.constant 1 : index
    %37 = memref.load %arg2[%c1_35, %c1_36] : memref<2x4xf32, #tpu.memory_space<smem>>
    %38 = vector.broadcast %37 : f32 to vector<2x128xf32>
    %39 = arith.mulf %36, %38 : vector<2x128xf32>
    %40 = arith.addf %34, %39 : vector<2x128xf32>
    %c0_37 = arith.constant 0 : index
    %c2_38 = arith.constant 2 : index
    %c0_39 = arith.constant 0 : index
    %c0_40 = arith.constant 0 : index
    %41 = vector.load %arg4[%c0_37, %c2_38, %c0_39, %c0_40] : memref<1x4x2x128xf32, #tpu.memory_space<vmem>>, vector<1x1x2x128xf32>
    %42 = vector.shape_cast %41 : vector<1x1x2x128xf32> to vector<2x128xf32>
    %c1_41 = arith.constant 1 : index
    %c2_42 = arith.constant 2 : index
    %43 = memref.load %arg2[%c1_41, %c2_42] : memref<2x4xf32, #tpu.memory_space<smem>>
    %44 = vector.broadcast %43 : f32 to vector<2x128xf32>
    %45 = arith.mulf %42, %44 : vector<2x128xf32>
    %46 = arith.addf %40, %45 : vector<2x128xf32>
    %c0_43 = arith.constant 0 : index
    %c3_44 = arith.constant 3 : index
    %c0_45 = arith.constant 0 : index
    %c0_46 = arith.constant 0 : index
    %47 = vector.load %arg4[%c0_43, %c3_44, %c0_45, %c0_46] : memref<1x4x2x128xf32, #tpu.memory_space<vmem>>, vector<1x1x2x128xf32>
    %48 = vector.shape_cast %47 : vector<1x1x2x128xf32> to vector<2x128xf32>
    %c1_47 = arith.constant 1 : index
    %c3_48 = arith.constant 3 : index
    %49 = memref.load %arg2[%c1_47, %c3_48] : memref<2x4xf32, #tpu.memory_space<smem>>
    %50 = vector.broadcast %49 : f32 to vector<2x128xf32>
    %51 = arith.mulf %48, %50 : vector<2x128xf32>
    %52 = arith.addf %46, %51 : vector<2x128xf32>
    %c1_49 = arith.constant 1 : index
    %53 = memref.load %arg3[%c1_49] : memref<2xf32, #tpu.memory_space<smem>>
    %54 = vector.broadcast %53 : f32 to vector<2x128xf32>
    %55 = arith.addf %52, %54 : vector<2x128xf32>
    %56 = math.tanh %55 : vector<2x128xf32>
    %c0_50 = arith.constant 0 : index
    %c1_51 = arith.constant 1 : index
    %c0_52 = arith.constant 0 : index
    %c0_53 = arith.constant 0 : index
    %57 = vector.load %arg5[%c0_50, %c1_51, %c0_52, %c0_53] : memref<1x2x2x128xf32, #tpu.memory_space<vmem>>, vector<1x1x2x128xf32>
    %58 = vector.shape_cast %57 : vector<1x1x2x128xf32> to vector<2x128xf32>
    %59 = vector.shape_cast %56 : vector<2x128xf32> to vector<1x1x2x128xf32>
    tpu.vector_store %arg5[%c0_50, %c1_51, %c0_52, %c0_53], %59 {strides = array<i32>} : memref<1x2x2x128xf32, #tpu.memory_space<vmem>>, vector<1x1x2x128xf32>,
    return
  }
  func.func @transform_0(%arg0: i32, %arg1: i32) -> (i32, i32) {
    %c0_i32 = arith.constant 0 : i32
    %c0_i32_0 = arith.constant 0 : i32
    %c0_i32_1 = arith.constant 0 : i32
    return %c0_i32, %c0_i32_0 : i32, i32
  }
  func.func @transform_1(%arg0: i32, %arg1: i32) -> i32 {
    %c0_i32 = arith.constant 0 : i32
    %c0_i32_0 = arith.constant 0 : i32
    return %c0_i32 : i32
  }
  func.func @transform_2(%arg0: i32, %arg1: i32) -> (i32, i32, i32, i32) {
    %c0_i32 = arith.constant 0 : i32
    %c0_i32_0 = arith.constant 0 : i32
    %c0_i32_1 = arith.constant 0 : i32
    return %arg0, %c0_i32, %arg1, %c0_i32_0 : i32, i32, i32, i32
  }
  func.func @transform_3(%arg0: i32, %arg1: i32) -> (i32, i32, i32, i32) {
    %c0_i32 = arith.constant 0 : i32
    %c0_i32_0 = arith.constant 0 : i32
    %c0_i32_1 = arith.constant 0 : i32
    return %arg0, %c0_i32, %arg1, %c0_i32_0 : i32, i32, i32, i32
  }
}

</mosaic_0001>

<llo_original>
// kernel: tpu_custom_call.1
$region0: #{tpu_custom_call.1}
  #allocation0 [shape = 'u32[]', space=smem, size = 0x4, offset = 0x4, fixed_abs, tag = 'smem constant byte address 0x4 - core index']
  #allocation1 [shape = 'u32[72,128]{1,0:T(1,128)}', space=vmem, size = 0x9000, scoped, tag = 'internal scratch']
  %s0 = inlined_call_operand.hbm [shape: f32[2,4], index: 0, kind: input, shape index: {}]
  %s1 = inlined_call_operand.hbm [shape: f32[2], index: 1, kind: input, shape index: {}]
  %s2 = inlined_call_operand.hbm [shape: f32[2,4,2,128], index: 2, kind: input, shape index: {}]
  %s3 = inlined_call_operand.hbm [shape: f32[2,2,2,128], index: 3, kind: output, shape index: {}]
  %s4 = sld [smem:[#allocation0]]
  $region57: #{tpu_custom_call.1} parent=0
    _
  %s6 = ssub.s32 1, %s4
  %s7 = scalar_select 0, %s6, %s4
  $region1: #{tpu_custom_call.1} parent=0
    #allocation2 [shape = 'u8[1024]{0}', space=smem, size = 0x400, scoped, tag = 'input window, operand 0, single buffered']
    #allocation3 [shape = 's32[2]{0}', space=sflag, size = 0x8, scoped, tag = 'scoped memory for tpu_custom_call.1']
    #allocation4 [shape = 's32[2]{0}', space=sflag, size = 0x8, scoped, tag = 'scoped memory for tpu_custom_call.1']
    #allocation5 [shape = 's32[2]{0}', space=sflag, size = 0x8, scoped, tag = 'scoped memory for tpu_custom_call.1']
    #allocation6 [shape = 'u8[512]{0}', space=smem, size = 0x200, scoped, tag = 'input window, operand 1, single buffered']
    #allocation7 [shape = 's32[1]{0}', space=sflag, size = 0x4, scoped, tag = 'scoped memory for tpu_custom_call.1']
    #allocation8 [shape = 'u8[8192]{0}', space=vmem, size = 0x2000, scoped, tag = 'input window, operand 2']
    #allocation9 [shape = 'u8[4096]{0}', space=vmem, size = 0x1000, scoped, tag = 'output window, operand 0']
    %8 = vsyncpa [#allocation5], 0
    %9 = vsyncpa [#allocation7], 0
    %10 = vsyncpa [#allocation3], 0
    %s11 = scalar_lea.sflag [#allocation3], 1
    %12 = vsyncpa %s11, 0
    %13 = vsyncpa [#allocation4], 0
    %s14 = scalar_lea.sflag [#allocation4], 1
    %15 = vsyncpa %s14, 0
    loop: start=0, step=1, limit=4
    $region2: #{tpu_custom_call.1} parent=1 // loop_pre_header
      _
    $region3: #{tpu_custom_call.1} parent=1 // loop_header
      %s17 = sphi 0, %s21
      %p18 = scmp.ge.s32.totalorder %s17, 4
      %s24 = sphi 0, %s36
      %s25 = sphi 0, %s32
      %s26 = sphi 0, %s24
      %s27 = sphi 0, %s25
      %s28 = sphi 0, %s26
      %s29 = sphi 0, %s27
      %s37 = sphi 0, %s37
      %s39 = sphi 0, %s37
      %s40 = sphi 0, %s39
      %s54 = sphi 0, %s40
      %s58 = sphi 0, %s58
      %s60 = sphi 0, %s58
      %s61 = sphi 0, %s60
      %s75 = sphi 0, %s61
      %s83 = sphi 0, %s85
      %s86 = sphi 0, %s83
      %s87 = sphi 0, %s86
      %s103 = sphi 0, %s87
      %s111 = sphi 0, %s113
      %s114 = sphi 0, %s111
      %s115 = sphi 0, %s114
      %s131 = sphi 0, %s115
    $region4: #{tpu_custom_call.1} parent=1 // loop_header_branch
      %20 = sbr.rel (%p18) target = $region8
    $region5: #{tpu_custom_call.1} parent=1 // loop_body
      %s22 = ssub.s32 %s17, 1
      %s23 = ssub.s32 %s17, 2
      %s30 = sadd.s32 1, %s25
      %p31 = scmp.ge.s32.totalorder %s30, 1
      %s32 = scalar_select %p31, 0, %s30
      %s33 = sadd.s32 1, %s24
      %s34 = scalar_select %p31, %s33, %s24
      %p35 = scmp.ge.s32.totalorder %s34, 2
      %s36 = scalar_select %p35, 0, %s34
      %s38 = sadd.s32 %s37, 1
      %p41 = scmp.eq.s32.totalorder %s17, 1
      %p42 = scmp.ne.s32.totalorder %s37, %s39
      %p43 = scmp.eq.s32.totalorder %s17, 0
      %p44 = por %p42, %p43
      %p45 = scmp.ne.s32.totalorder %s37, %s39
      %p46 = scmp.eq.s32.totalorder %s22, 1
      %p47 = por %p45, %p46
      %p48 = scmp.ne.s32.totalorder %s39, %s40
      %p49 = scmp.eq.s32.totalorder %s22, 0
      %p50 = por %p48, %p49
      %p51 = scmp.ne.s32.totalorder %s39, %s40
      %p52 = scmp.eq.s32.totalorder %s23, 1
      %p53 = por %p51, %p52
      %p55 = scmp.ne.s32.totalorder %s40, %s54
      %p56 = scmp.eq.s32.totalorder %s23, 0
      %p57 = por %p55, %p56
      %s59 = sadd.s32 %s58, 1
      %p62 = scmp.eq.s32.totalorder %s17, 1
      %p63 = scmp.ne.s32.totalorder %s58, %s60
      %p64 = scmp.eq.s32.totalorder %s17, 0
      %p65 = por %p63, %p64
      %p66 = scmp.ne.s32.totalorder %s58, %s60
      %p67 = scmp.eq.s32.totalorder %s22, 1
      %p68 = por %p66, %p67
      %p69 = scmp.ne.s32.totalorder %s60, %s61
      %p70 = scmp.eq.s32.totalorder %s22, 0
      %p71 = por %p69, %p70
      %p72 = scmp.ne.s32.totalorder %s60, %s61
      %p73 = scmp.eq.s32.totalorder %s23, 1
      %p74 = por %p72, %p73
      %p76 = scmp.ne.s32.totalorder %s61, %s75
      %p77 = scmp.eq.s32.totalorder %s23, 0
      %p78 = por %p76, %p77
      %s79 = ssub.s32 %s24, %s36
      %s80 = ssub.s32 %s25, %s32
      %s81 = sor.u32 %s79, %s80
      %p82 = scmp.eq.s32.totalorder %s81, 0
      %s84 = sadd.s32 %s83, 1
      %s85 = scalar_select %p82, %s83, %s84
      %p88 = pneg %p82
      %p89 = scmp.eq.s32.totalorder %s17, 1
      %p90 = por %p88, %p89
      %p91 = scmp.ne.s32.totalorder %s83, %s86
      %p92 = scmp.eq.s32.totalorder %s17, 0
      %p93 = por %p91, %p92
      %p94 = scmp.ne.s32.totalorder %s83, %s86
      %p95 = scmp.eq.s32.totalorder %s22, 1
      %p96 = por %p94, %p95
      %p97 = scmp.ne.s32.totalorder %s86, %s87
      %p98 = scmp.eq.s32.totalorder %s22, 0
      %p99 = por %p97, %p98
      %p100 = scmp.ne.s32.totalorder %s86, %s87
      %p101 = scmp.eq.s32.totalorder %s23, 1
      %p102 = por %p100, %p101
      %p104 = scmp.ne.s32.totalorder %s87, %s103
      %p105 = scmp.eq.s32.totalorder %s23, 0
      %p106 = por %p104, %p105
      %s107 = ssub.s32 %s24, %s36
      %s108 = ssub.s32 %s25, %s32
      %s109 = sor.u32 %s107, %s108
      %p110 = scmp.eq.s32.totalorder %s109, 0
      %s112 = sadd.s32 %s111, 1
      %s113 = scalar_select %p110, %s111, %s112
      %p116 = pneg %p110
      %p117 = scmp.eq.s32.totalorder %s17, 1
      %p118 = por %p116, %p117
      %p119 = scmp.ne.s32.totalorder %s111, %s114
      %p120 = scmp.eq.s32.totalorder %s17, 0
      %p121 = por %p119, %p120
      %p122 = scmp.ne.s32.totalorder %s111, %s114
      %p123 = scmp.eq.s32.totalorder %s22, 1
      %p124 = por %p122, %p123
      %p125 = scmp.ne.s32.totalorder %s114, %s115
      %p126 = scmp.eq.s32.totalorder %s22, 0
      %p127 = por %p125, %p126
      %p128 = scmp.ne.s32.totalorder %s114, %s115
      %p129 = scmp.eq.s32.totalorder %s23, 1
      %p130 = por %p128, %p129
      %p132 = scmp.ne.s32.totalorder %s115, %s131
      %p133 = scmp.eq.s32.totalorder %s23, 0
      %p134 = por %p132, %p133
      %p135 = scmp.le.s32.totalorder 1, %s17
      %p136 = scmp.lt.s32.totalorder %s17, 3
      %p137 = pnand %p135, %p136
      %p138 = pneg %p137
      // Predicated region
      $region9: #{tpu_custom_call.1} parent=5 // pred_check
        _
      $region10: #{tpu_custom_call.1} parent=5 // pred_check_branch
        %140 = sbr.rel (%p137) target = $region12
      $region11: #{tpu_custom_call.1} parent=5 // pred_region
        %s141 = ssub.s32 %s17, 1
        // Predicated region
        $region13: #{tpu_custom_call.1} parent=11 // pred_check
          %p142 = pneg %p50
        $region14: #{tpu_custom_call.1} parent=11 // pred_check_branch
          %144 = sbr.rel (%p142) target = $region16
        $region15: #{tpu_custom_call.1} parent=11 // pred_region
          %146 = vsyncadd [#allocation5], 0
          %s148 = sshll.u32 %s0, 4
          %s149 = int_to_ptr.hbm [resolvable:$true] %s148
          %151 = dma.hbm_to_smem %s149, 32, [#allocation2], [#allocation5]
        $region16: #{tpu_custom_call.1} parent=11 // pred_fallthru
          _
        // Predicated region
        $region17: #{tpu_custom_call.1} parent=11 // pred_check
          %p152 = pneg %p71
        $region18: #{tpu_custom_call.1} parent=11 // pred_check_branch
          %154 = sbr.rel (%p152) target = $region20
        $region19: #{tpu_custom_call.1} parent=11 // pred_region
          %156 = vsyncadd [#allocation7], 0
          %s158 = sshll.u32 %s1, 4
          %s159 = int_to_ptr.hbm [resolvable:$true] %s158
          %161 = dma.hbm_to_smem %s159, 16, [#allocation6], [#allocation7]
        $region20: #{tpu_custom_call.1} parent=11 // pred_fallthru
          _
      $region12: #{tpu_custom_call.1} parent=5 // pred_fallthru
        _
      %p162 = scmp.lt.s32.totalorder %s17, 2
      // Predicated region
      $region21: #{tpu_custom_call.1} parent=5 // pred_check
        %p163 = pneg %p162
      $region22: #{tpu_custom_call.1} parent=5 // pred_check_branch
        %165 = sbr.rel (%p163) target = $region24
      $region23: #{tpu_custom_call.1} parent=5 // pred_region
        // Predicated region
        $region25: #{tpu_custom_call.1} parent=23 // pred_check
          %p166 = pneg %p93
        $region26: #{tpu_custom_call.1} parent=23 // pred_check_branch
          %168 = sbr.rel (%p166) target = $region28
        $region27: #{tpu_custom_call.1} parent=23 // pred_region
          %s169 = sand.u32 %s83, 1
          %s170 = scalar_lea.sflag [#allocation3], %s169
          %s171 = sand.u32 %s83, 1
          %s172 = smul.addr %s171, 8
          %s173 = scalar_lea.vmem [#allocation8], %s172
          %175 = vsyncadd %s170, 0
          %s176 = smul.addr %s24, 4
          %s177 = sadd.s32 %s25, %s176
          %s178 = smul.addr %s177, 2
          %s179 = scalar_lea.hbm %s2, %s178
          %s180 = sshll.u32 %s179, 4
          %s181 = int_to_ptr.hbm [resolvable:$true] %s180
          %s182 = sshll.u32 %s173, 4
          %s183 = int_to_ptr.vmem [resolvable:$true] %s182
          %188 = dma.hbm_to_vmem [thread:$0]  %s181, 128, %s183, %s170, 32, 32, 2
        $region28: #{tpu_custom_call.1} parent=23 // pred_fallthru
          _
      $region24: #{tpu_custom_call.1} parent=5 // pred_fallthru
        _
      %p189 = scmp.le.s32.totalorder 1, %s17
      %p190 = scmp.lt.s32.totalorder %s17, 3
      %p191 = pnand %p189, %p190
      %p192 = pneg %p191
      // Predicated region
      $region29: #{tpu_custom_call.1} parent=5 // pred_check
        _
      $region30: #{tpu_custom_call.1} parent=5 // pred_check_branch
        %194 = sbr.rel (%p191) target = $region32
      $region31: #{tpu_custom_call.1} parent=5 // pred_region
        %s195 = ssub.s32 %s17, 1
        // Predicated region
        $region33: #{tpu_custom_call.1} parent=31 // pred_check
          %p196 = pneg %p50
        $region34: #{tpu_custom_call.1} parent=31 // pred_check_branch
          %198 = sbr.rel (%p196) target = $region36
        $region35: #{tpu_custom_call.1} parent=31 // pred_region
          %200 = dma.done [#allocation5], 32
        $region36: #{tpu_custom_call.1} parent=31 // pred_fallthru
          _
        // Predicated region
        $region37: #{tpu_custom_call.1} parent=31 // pred_check
          %p201 = pneg %p71
        $region38: #{tpu_custom_call.1} parent=31 // pred_check_branch
          %203 = sbr.rel (%p201) target = $region40
        $region39: #{tpu_custom_call.1} parent=31 // pred_region
          %205 = dma.done [#allocation7], 16
        $region40: #{tpu_custom_call.1} parent=31 // pred_fallthru
          _
        %s206 = sand.u32 %s86, 1
        %s207 = scalar_lea.sflag [#allocation3], %s206
        %s208 = sand.u32 %s86, 1
        %s209 = smul.addr %s208, 8
        %s210 = scalar_lea.vmem [#allocation8], %s209
        // Predicated region
        $region41: #{tpu_custom_call.1} parent=31 // pred_check
          %p211 = pneg %p99
        $region42: #{tpu_custom_call.1} parent=31 // pred_check_branch
          %213 = sbr.rel (%p211) target = $region44
        $region43: #{tpu_custom_call.1} parent=31 // pred_region
          %215 = dma.done %s207, 128
        $region44: #{tpu_custom_call.1} parent=31 // pred_fallthru
          _
        %216 = sfence
        %p217 = pneg %p50
        %p218 = pneg %p47
        %p219 = pneg %p71
        %p220 = pneg %p68
        %s221 = sand.u32 %s86, 1
        %s222 = scalar_lea.sflag [#allocation3], %s221
        %s223 = sand.u32 %s86, 1
        %s224 = smul.addr %s223, 8
        %s225 = scalar_lea.vmem [#allocation8], %s224
        %p226 = pneg %p99
        %p227 = pneg %p96
        %p228 = pneg %p127
        %p229 = pneg %p124
        %s230 = sand.u32 %s114, 1
        %s231 = scalar_lea.sflag [#allocation4], %s230
        %s232 = sand.u32 %s114, 1
        %s233 = smul.addr %s232, 4
        %s234 = scalar_lea.vmem [#allocation9], %s233
        %v235 = vld [vmem:[%s210] sm:$0x3]
        %s236 = sld [smem:[#allocation2]]
        %v237 = vstv %s236
        %v238 = vmul.f32 %v235, %v237
        %s239 = scalar_lea.vmem %s210, 2 [#allocation8]
        %v240 = vld [vmem:[%s239] sm:$0x3]
        %s241 = sld [smem:[#allocation2 + $0x1]]
        %v242 = vstv %s241
        %v243 = vmul.f32 %v240, %v242
        %v244 = vadd.f32 %v238, %v243
        %s245 = scalar_lea.vmem %s210, 4 [#allocation8]
        %v246 = vld [vmem:[%s245] sm:$0x3]
        %s247 = sld [smem:[#allocation2 + $0x2]]
        %v248 = vstv %s247
        %v249 = vmul.f32 %v246, %v248
        %v250 = vadd.f32 %v244, %v249
        %s251 = scalar_lea.vmem %s210, 6 [#allocation8]
        %v252 = vld [vmem:[%s251] sm:$0x3]
        %s253 = sld [smem:[#allocation2 + $0x3]]
        %v254 = vstv %s253
        %v255 = vmul.f32 %v252, %v254
        %v256 = vadd.f32 %v250, %v255
        %s257 = sld [smem:[#allocation6]]
        %v258 = vstv %s257
        %v259 = vadd.f32 %v256, %v258
        %v260 = vtanh.pop %v259
        %261 = vst [vmem:[%s234] sm:$0x3] %v260
        %v262 = vld [vmem:[%s210] sm:$0x3]
        %s263 = sld [smem:[#allocation2 + $0x80]]
        %v264 = vstv %s263
        %v265 = vmul.f32 %v262, %v264
        %v266 = vld [vmem:[%s239] sm:$0x3]
        %s267 = sld [smem:[#allocation2 + $0x81]]
        %v268 = vstv %s267
        %v269 = vmul.f32 %v266, %v268
        %v270 = vadd.f32 %v265, %v269
        %v271 = vld [vmem:[%s245] sm:$0x3]
        %s272 = sld [smem:[#allocation2 + $0x82]]
        %v273 = vstv %s272
        %v274 = vmul.f32 %v271, %v273
        %v275 = vadd.f32 %v270, %v274
        %v276 = vld [vmem:[%s251] sm:$0x3]
        %s277 = sld [smem:[#allocation2 + $0x83]]
        %v278 = vstv %s277
        %v279 = vmul.f32 %v276, %v278
        %v280 = vadd.f32 %v275, %v279
        %s281 = sld [smem:[#allocation6 + $0x1]]
        %v282 = vstv %s281
        %v283 = vadd.f32 %v280, %v282
        %v284 = vtanh.pop %v283
        %s285 = scalar_lea.vmem %s234, 2 [#allocation9]
        %286 = vst [vmem:[%s285] sm:$0x3] %v284
        %s287 = sand.u32 %s114, 1
        %s288 = scalar_lea.sflag [#allocation4], %s287
        %s289 = sand.u32 %s114, 1
        %s290 = smul.addr %s289, 4
        %s291 = scalar_lea.vmem [#allocation9], %s290
        // Predicated region
        $region45: #{tpu_custom_call.1} parent=31 // pred_check
          %p292 = pneg %p124
        $region46: #{tpu_custom_call.1} parent=31 // pred_check_branch
          %294 = sbr.rel (%p292) target = $region48
        $region47: #{tpu_custom_call.1} parent=31 // pred_region
          %296 = vsyncadd %s288, 0
          %s297 = smul.addr %s26, 2
          %s298 = sadd.s32 %s27, %s297
          %s299 = smul.addr %s298, 2
          %s300 = scalar_lea.hbm %s3, %s299
          %s301 = sshll.u32 %s291, 4
          %s302 = int_to_ptr.vmem [resolvable:$true] %s301
          %s303 = sshll.u32 %s300, 4
          %s304 = int_to_ptr.hbm [resolvable:$true] %s303
          %309 = dma.vmem_to_hbm [thread:$0]  %s302, 64, %s304, %s288, 32, 32, 2
        $region48: #{tpu_custom_call.1} parent=31 // pred_fallthru
          _
      $region32: #{tpu_custom_call.1} parent=5 // pred_fallthru
        _
      %p310 = scmp.le.s32.totalorder 2, %s17
      // Predicated region
      $region49: #{tpu_custom_call.1} parent=5 // pred_check
        %p311 = pneg %p310
      $region50: #{tpu_custom_call.1} parent=5 // pred_check_branch
        %313 = sbr.rel (%p311) target = $region52
      $region51: #{tpu_custom_call.1} parent=5 // pred_region
        %s314 = ssub.s32 %s17, 2
        // Predicated region
        $region53: #{tpu_custom_call.1} parent=51 // pred_check
          %p315 = pneg %p130
        $region54: #{tpu_custom_call.1} parent=51 // pred_check_branch
          %317 = sbr.rel (%p315) target = $region56
        $region55: #{tpu_custom_call.1} parent=51 // pred_region
          %s318 = sand.u32 %s115, 1
          %s319 = scalar_lea.sflag [#allocation4], %s318
          %s320 = sand.u32 %s115, 1
          %s321 = smul.addr %s320, 4
          %s322 = scalar_lea.vmem [#allocation9], %s321
          %324 = dma.done %s319, 64
        $region56: #{tpu_custom_call.1} parent=51 // pred_fallthru
          _
      $region52: #{tpu_custom_call.1} parent=5 // pred_fallthru
        _
    $region6: #{tpu_custom_call.1} parent=1 // loop_footer
      %s21 = sadd.s32 1, %s17
    $region7: #{tpu_custom_call.1} parent=1 // loop_footer_branch
      %16 = sbr.rel target = $region3
    $region8: #{tpu_custom_call.1} parent=1 // loop_exit
      _
    %325 = vsyncpa [#allocation3], 1
    %s326 = scalar_lea.sflag [#allocation3], 1
    %327 = vsyncpa %s326, 1
    %328 = vsyncpa [#allocation4], 1
    %s329 = scalar_lea.sflag [#allocation4], 1
    %330 = vsyncpa %s329, 1
    %331 = vsyncpa [#allocation5], 1
    %s332 = scalar_lea.sflag [#allocation5], 1
    %333 = vsyncpa %s332, 1
    %334 = vsyncpa [#allocation7], 1

</llo_original>
